<compile_context>
chip_gen: v7x
topology: tpu7x:2x2x1
jax: 0.10.0
libtpu: 0.0.40
codegen_flags: <defaults>
</compile_context>

<pallas_src>
import functools

import jax
import jax.numpy as jnp
from jax.experimental import pallas as pl
from jax.experimental.pallas import tpu as pltpu

_NEG_BIAS = -1e30  # finite "-inf": exp underflows to 0, avoids 0*inf NaNs


def _round_up(x, m):
    return ((x + m - 1) // m) * m


def _sublane_multiple(dtype):
    # f32 -> 8, bf16 -> 16, int8/fp8 -> 32
    return max(8, 32 // max(jnp.dtype(dtype).itemsize, 1))


def prepare_params(weight, bias, *, param_dtype=jnp.bfloat16, lane_multiple=256):
    """One-time parameter prep (call OUTSIDE the training/inference step).

    weight: (num_classes, in_channels)  (PyTorch nn.Linear layout)
    bias:   (num_classes,)
    Returns (w_t, bias2):
      w_t:   (cin_pad, n_pad) param_dtype, transposed + zero-padded weight
      bias2: (1, n_pad) f32, padded classes set to a large negative value
    """
    n, cin = weight.shape
    n_pad = _round_up(n, lane_multiple)
    cin_pad = _round_up(cin, 128)            # lane-dense K, full MXU cadence
    w_t = (jnp.zeros((cin_pad, n_pad), param_dtype)
           .at[:cin, :n].set(weight.astype(param_dtype).T))
    bias2 = jnp.full((1, n_pad), _NEG_BIAS, dtype=jnp.float32)
    bias2 = bias2.at[0, :n].set(bias.astype(jnp.float32))
    return w_t, bias2


def _classify_loss_kernel(x_ref, w_ref, b_ref, labels_ref, loss_ref, acc_ref,
                          *, tile_b, batch):
    # Grid queries hoisted to the top level: they must NOT be bound inside a
    # pl.when body (they would land inside a cond branch jaxpr, which the
    # interpret/fallback lowering cannot handle).
    i = pl.program_id(0)                     # batch-tile index
    k = pl.program_id(1)                     # K (feature) tile index
    nk = pl.num_programs(1)

    @pl.when(k == 0)
    def _():
        # Initialise the f32 accumulator with the broadcast bias (removes the
        # (tile_b, n_pad) bias add from the epilogue). Padded classes start at
        # -1e30 and accumulate only zeros from the zero-padded weight columns.
        acc_ref[...] = jnp.broadcast_to(b_ref[...], acc_ref.shape)

    # MXU matmul on bf16 operands, f32 accumulation.
    acc_ref[...] += jnp.dot(x_ref[...], w_ref[...],
                            preferred_element_type=jnp.float32)

    @pl.when(k == nk - 1)
    def _():
        logits = acc_ref[...]                                    # (TB, Npad) f32
        # Stable log-sum-exp; padded classes sit at ~-1e30 -> exp == 0.
        m = jnp.max(logits, axis=-1, keepdims=True)              # (TB, 1)
        z = logits - m
        lse = jnp.log(jnp.sum(jnp.exp(z), axis=-1, keepdims=True)) + m

        labels = labels_ref[...]                                 # (TB, 1) int32
        cls_idx = jax.lax.broadcasted_iota(jnp.int32, logits.shape, 1)
        correct = jnp.sum(jnp.where(cls_idx == labels, logits, 0.0),
                          axis=-1, keepdims=True)                # (TB, 1)
        per_example = lse - correct                              # (TB, 1)

        # Mask rows beyond the true batch (batch padded to a tile multiple).
        row = (i * tile_b
               + jax.lax.broadcasted_iota(jnp.int32, per_example.shape, 0))
        per_example = jnp.where(row < batch, per_example, 0.0)

        partial = jnp.sum(per_example, keepdims=True)            # (1, 1)
        # Dense (1, 8, 128) store (unmasked vst); wrapper reads [:, 0, 0].
        loss_ref[...] = jnp.broadcast_to(partial, loss_ref.shape)


def _vmem_budget_bytes():
    """Usable VMEM budget, generation-aware; leaves headroom for the compiler."""
    try:
        cap = pltpu.get_tpu_info().vmem_capacity_bytes
    except Exception:
        cap = 64 << 20      # conservative (v7x-sized) default when not on a TPU
    return min(int(0.75 * cap), cap - (16 << 20))


def _vmem_need_bytes(tb, tk, n_pad, x_itemsize, w_itemsize):
    return (2 * tb * tk * x_itemsize          # x tiles (double-buffered)
            + 2 * tk * n_pad * w_itemsize     # W^T tiles (resident if tk==cin_pad)
            + 2 * n_pad * 4                   # bias (f32, resident)
            + 2 * tb * 4                      # labels (int32)
            + 2 * 8 * 128 * 4                 # partial-loss output block
            + tb * n_pad * 4)                 # f32 accumulator scratch


def _select_tiles(tile_b_req, batch, cin_pad, n_pad, x_itemsize, w_itemsize,
                  budget, sublane):
    """Prefer full-K (weight-resident) tiles; trade tile_b down before tiling K."""
    tb = max(sublane,
             _round_up(min(tile_b_req, _round_up(batch, sublane)), sublane))
    tbs = []
    while True:
        tbs.append(tb)
        nxt = max(sublane, (tb // 2 // sublane) * sublane)
        if nxt == tb:
            break
        tb = nxt
    tks = [cin_pad] + [t for t in (2048, 1024, 512, 256, 128)
                       if t < cin_pad and cin_pad % t == 0]
    for tk in tks:
        for tb in tbs:
            if _vmem_need_bytes(tb, tk, n_pad, x_itemsize, w_itemsize) <= budget:
                return tb, tk
    return tbs[-1], tks[-1]


def classify_forward(x, w_t, bias2, labels, *, tile_b=256):
    """x: (B, Cin); w_t/bias2 from prepare_params; labels: (B,) int.
    Returns scalar f32 mean cross-entropy loss."""
    B, cin = x.shape
    cin_pad, n_pad = w_t.shape
    assert cin <= cin_pad

    compute_dtype = w_t.dtype
    x_itemsize = jnp.dtype(compute_dtype).itemsize
    w_itemsize = jnp.dtype(w_t.dtype).itemsize
    sublane = _sublane_multiple(compute_dtype)

    budget = _vmem_budget_bytes()
    tile_b_eff, tile_k_eff = _select_tiles(
        tile_b, B, cin_pad, n_pad, x_itemsize, w_itemsize, budget, sublane)
    nk = cin_pad // tile_k_eff
    b_total = _round_up(B, tile_b_eff)
    nb = b_total // tile_b_eff

    # Cast once to the matmul dtype; pad only when strictly necessary.
    xw = x.astype(compute_dtype)
    if (b_total, cin_pad) != (B, cin):
        xw = jnp.zeros((b_total, cin_pad), compute_dtype).at[:B, :cin].set(xw)
    labels2 = jnp.zeros((b_total, 1), jnp.int32).at[:B, 0].set(
        labels.astype(jnp.int32))

    kernel = functools.partial(_classify_loss_kernel,
                               tile_b=tile_b_eff, batch=B)

    need = _vmem_need_bytes(tile_b_eff, tile_k_eff, n_pad, x_itemsize, w_itemsize)
    vmem_limit = max(int(1.25 * need) + (2 << 20), 16 << 20)
    if need <= budget:
        vmem_limit = min(vmem_limit, budget)

    # TODO(synk): if K ends up tiled (weight not VMEM-resident) and profiling
    # shows exposed DMA waits, add pipeline_mode=pl.Buffered(3) on the x spec.
    partials = pl.pallas_call(
        kernel,
        out_shape=jax.ShapeDtypeStruct((nb, 8, 128), jnp.float32),
        grid_spec=pltpu.PrefetchScalarGridSpec(
            num_scalar_prefetch=0,
            grid=(nb, nk),
            in_specs=[
                pl.BlockSpec((tile_b_eff, tile_k_eff), lambda i, k: (i, k)),  # x
                pl.BlockSpec((tile_k_eff, n_pad), lambda i, k: (k, 0)),       # W^T
                pl.BlockSpec((1, n_pad), lambda i, k: (0, 0)),                # bias
                pl.BlockSpec((tile_b_eff, 1), lambda i, k: (i, 0)),           # labels
            ],
            out_specs=pl.BlockSpec((1, 8, 128), lambda i, k: (i, 0, 0)),
            scratch_shapes=[pltpu.VMEM((tile_b_eff, n_pad), jnp.float32)],
        ),
        compiler_params=pltpu.CompilerParams(
            dimension_semantics=("parallel", "arbitrary"),
            vmem_limit_bytes=vmem_limit,
        ),
    )(xw, w_t, bias2, labels2)

    return jnp.sum(partials[:, 0, 0]) / jnp.float32(B)


def _reference_loss(x, weight, bias, labels, compute_dtype=None):
    if compute_dtype is not None:   # emulate reduced-precision matmul operands
        x = x.astype(compute_dtype).astype(jnp.float32)
        weight = weight.astype(compute_dtype).astype(jnp.float32)
    logits = x.astype(jnp.float32) @ weight.astype(jnp.float32).T + bias
    lse = jax.scipy.special.logsumexp(logits, axis=-1)
    return jnp.mean(lse - logits[jnp.arange(x.shape[0]), labels])


if __name__ == "__main__":
    # Small, deterministic setup consistent with the module:
    #   in_channels=32, num_classes=16, batch=8
    B, Cin, N = 8, 32, 16
    key = jax.random.PRNGKey(0)
    k_x, k_w, k_b, k_l, k_x2, k_l2 = jax.random.split(key, 6)

    x = jax.random.normal(k_x, (B, Cin), dtype=jnp.float32)
    bound = 1.0 / (Cin ** 0.5)
    weight = jax.random.uniform(k_w, (N, Cin), dtype=jnp.float32,
                                minval=-bound, maxval=bound)
    bias = jax.random.uniform(k_b, (N,), dtype=jnp.float32,
                              minval=-bound, maxval=bound)
    labels = jax.random.randint(k_l, (B,), 0, N, dtype=jnp.int32)

    # one-time parameter prep (transpose, bf16 cast, lane-dense Cin/class padding)
    w_t, bias2 = prepare_params(weight, bias)

    loss = classify_forward(x, w_t, bias2, labels)
    loss = jax.block_until_ready(loss)
    loss_ref = _reference_loss(x, weight, bias, labels, compute_dtype=w_t.dtype)
    assert jnp.allclose(loss, loss_ref, rtol=5e-3, atol=5e-3), (loss, loss_ref)

    # second config: batch not a multiple of the tile -> exercises a multi-tile
    # ("parallel") batch grid and padded-row masking
    B2 = 40
    x2 = jax.random.normal(k_x2, (B2, Cin), dtype=jnp.float32)
    labels_2 = jax.random.randint(k_l2, (B2,), 0, N, dtype=jnp.int32)
    loss2 = classify_forward(x2, w_t, bias2, labels_2, tile_b=16)
    loss2 = jax.block_until_ready(loss2)
    loss2_ref = _reference_loss(x2, weight, bias, labels_2, compute_dtype=w_t.dtype)
    assert jnp.allclose(loss2, loss2_ref, rtol=5e-3, atol=5e-3), (loss2, loss2_ref)

    # TODO(synk): the `loss` criterion is dependency-injected in the PyTorch
    # module; cross-entropy (the standard classification criterion) is assumed.
    # TODO(synk): on v7x, fp8(e4m3) weights + a per-tensor scale folded into the
    # logits could halve weight traffic further for very large class counts.
    print("KERNEL_OK")
</pallas_src>

<mosaic_0001>
module attributes {stable_mosaic.version = 11 : i64} {
  func.func @_classify_loss_kernel(%arg0: i32, %arg1: i32, %arg2: memref<16x128xbf16, #tpu.memory_space<vmem>>, %arg3: memref<128x256xbf16, #tpu.memory_space<vmem>>, %arg4: memref<1x256xf32, #tpu.memory_space<vmem>>, %arg5: memref<16x1xi32, #tpu.memory_space<vmem>>, %arg6: memref<1x8x128xf32, #tpu.memory_space<vmem>>, %arg7: memref<16x256xf32, #tpu.memory_space<vmem>>) attributes {dimension_semantics = [#tpu.dimension_semantics<parallel>, #tpu.dimension_semantics<arbitrary>], iteration_bounds = array<i64: 1, 1>, scalar_prefetch = 0 : i64, scratch_operands = 1 : i64, tpu.core_type = #tpu.core_type<tc>, window_params = [{transform_indices = @transform_0, window_bounds = array<i64: 16, 128>}, {transform_indices = @transform_1, window_bounds = array<i64: 128, 256>}, {pipeline_mode = #tpu.pipeline_mode<synchronous>, transform_indices = @transform_2, window_bounds = array<i64: 1, 256>}, {transform_indices = @transform_3, window_bounds = array<i64: 16, 1>}, {transform_indices = @transform_4, window_bounds = array<i64: 1, 8, 128>}]} {
    %c0_i32 = arith.constant 0 : i32
    %0 = arith.cmpi eq, %arg1, %c0_i32 : i32
    %1 = arith.extui %0 : i1 to i32
    %c0_i32_0 = arith.constant 0 : i32
    %2 = arith.cmpi ne, %1, %c0_i32_0 : i32
    scf.if %2 {
      %c0_10 = arith.constant 0 : index
      %c0_11 = arith.constant 0 : index
      %12 = vector.load %arg4[%c0_10, %c0_11] : memref<1x256xf32, #tpu.memory_space<vmem>>, vector<1x256xf32>
      %13 = vector.shape_cast %12 : vector<1x256xf32> to vector<1x256xf32>
      %14 = vector.broadcast %13 : vector<1x256xf32> to vector<16x256xf32>
      %c0_12 = arith.constant 0 : index
      %c0_13 = arith.constant 0 : index
      %15 = vector.load %arg7[%c0_12, %c0_13] : memref<16x256xf32, #tpu.memory_space<vmem>>, vector<16x256xf32>
      tpu.vector_store %arg7[%c0_12, %c0_13], %14 {strides = array<i32>} : memref<16x256xf32, #tpu.memory_space<vmem>>, vector<16x256xf32>,
    } else {
    }
    %c0 = arith.constant 0 : index
    %c0_1 = arith.constant 0 : index
    %3 = vector.load %arg7[%c0, %c0_1] : memref<16x256xf32, #tpu.memory_space<vmem>>, vector<16x256xf32>
    %c0_2 = arith.constant 0 : index
    %c0_3 = arith.constant 0 : index
    %4 = vector.load %arg2[%c0_2, %c0_3] : memref<16x128xbf16, #tpu.memory_space<vmem>>, vector<16x128xbf16>
    %c0_4 = arith.constant 0 : index
    %c0_5 = arith.constant 0 : index
    %5 = vector.load %arg3[%c0_4, %c0_5] : memref<128x256xbf16, #tpu.memory_space<vmem>>, vector<128x256xbf16>
    %cst = arith.constant dense<0.000000e+00> : vector<16x256xf32>
    %6 = tpu.matmul %4, %5, %cst {dimension_numbers = #tpu.dot_dimension_numbers<[1], [0], [0], [1], [0, 0, 1, 1], [], []>} : vector<16x128xbf16>, vector<128x256xbf16>, vector<16x256xf32> -> vector<16x256xf32>
    %7 = arith.addf %3, %6 : vector<16x256xf32>
    %c0_6 = arith.constant 0 : index
    %c0_7 = arith.constant 0 : index
    %8 = vector.load %arg7[%c0_6, %c0_7] : memref<16x256xf32, #tpu.memory_space<vmem>>, vector<16x256xf32>
    tpu.vector_store %arg7[%c0_6, %c0_7], %7 {strides = array<i32>} : memref<16x256xf32, #tpu.memory_space<vmem>>, vector<16x256xf32>,
    %c0_i32_8 = arith.constant 0 : i32
    %9 = arith.cmpi eq, %arg1, %c0_i32_8 : i32
    %10 = arith.extui %9 : i1 to i32
    %c0_i32_9 = arith.constant 0 : i32
    %11 = arith.cmpi ne, %10, %c0_i32_9 : i32
    scf.if %11 {
      %c0_10 = arith.constant 0 : index
      %c0_11 = arith.constant 0 : index
      %12 = vector.load %arg7[%c0_10, %c0_11] : memref<16x256xf32, #tpu.memory_space<vmem>>, vector<16x256xf32>
      %cst_12 = arith.constant dense<0xFF800000> : vector<16xf32>
      %13 = vector.multi_reduction <maximumf>, %12, %cst_12 [1] : vector<16x256xf32> to vector<16xf32>
      %14 = vector.shape_cast %13 : vector<16xf32> to vector<16x1xf32>
      %15 = vector.broadcast %14 : vector<16x1xf32> to vector<16x256xf32>
      %16 = arith.subf %12, %15 : vector<16x256xf32>
      %17 = math.exp %16 : vector<16x256xf32>
      %cst_13 = arith.constant dense<0.000000e+00> : vector<16xf32>
      %18 = vector.multi_reduction <add>, %17, %cst_13 [1] : vector<16x256xf32> to vector<16xf32>
      %19 = vector.shape_cast %18 : vector<16xf32> to vector<16x1xf32>
      %20 = math.log %19 : vector<16x1xf32>
      %21 = arith.addf %20, %14 : vector<16x1xf32>
      %c0_14 = arith.constant 0 : index
      %c0_15 = arith.constant 0 : index
      %22 = vector.load %arg5[%c0_14, %c0_15] : memref<16x1xi32, #tpu.memory_space<vmem>>, vector<16x1xi32>
      %23 = tpu.iota {dimensions = array<i32: 1>} : vector<16x256xi32>
      %24 = vector.broadcast %22 : vector<16x1xi32> to vector<16x256xi32>
      %25 = arith.cmpi eq, %23, %24 : vector<16x256xi32>
      %cst_16 = arith.constant 0.000000e+00 : f32
      %26 = vector.broadcast %cst_16 : f32 to vector<16x256xf32>
      %27 = arith.select %25, %12, %26 : vector<16x256xi1>, vector<16x256xf32>
      %cst_17 = arith.constant dense<0.000000e+00> : vector<16xf32>
      %28 = vector.multi_reduction <add>, %27, %cst_17 [1] : vector<16x256xf32> to vector<16xf32>
      %29 = vector.shape_cast %28 : vector<16xf32> to vector<16x1xf32>
      %30 = arith.subf %21, %29 : vector<16x1xf32>
      %c16_i32 = arith.constant 16 : i32
      %31 = arith.muli %arg0, %c16_i32 : i32
      %32 = tpu.iota {dimensions = array<i32: 0>} : vector<16x1xi32>
      %33 = vector.broadcast %31 : i32 to vector<16x1xi32>
      %34 = arith.addi %33, %32 : vector<16x1xi32>
      %c8_i32 = arith.constant 8 : i32
      %35 = vector.broadcast %c8_i32 : i32 to vector<16x1xi32>
      %36 = arith.cmpi slt, %34, %35 : vector<16x1xi32>
      %cst_18 = arith.constant 0.000000e+00 : f32
      %37 = vector.broadcast %cst_18 : f32 to vector<16x1xf32>
      %38 = arith.select %36, %30, %37 : vector<16x1xi1>, vector<16x1xf32>
      %39 = vector.shape_cast %38 : vector<16x1xf32> to vector<1x16x1xf32>
      %cst_19 = arith.constant dense<0.000000e+00> : vector<1xf32>
      %40 = vector.multi_reduction <add>, %39, %cst_19 [1, 2] : vector<1x16x1xf32> to vector<1xf32>
      %41 = vector.shape_cast %40 : vector<1xf32> to vector<1x1x1xf32>
      %42 = vector.extract %41[0, 0, 0] : f32 from vector<1x1x1xf32>
      %43 = vector.broadcast %42 : f32 to vector<1x1xf32>
      %44 = vector.shape_cast %43 : vector<1x1xf32> to vector<1x1x1xf32>
      %45 = vector.broadcast %44 : vector<1x1x1xf32> to vector<1x8x128xf32>
      %c0_20 = arith.constant 0 : index
      %c0_21 = arith.constant 0 : index
      %c0_22 = arith.constant 0 : index
      %46 = vector.load %arg6[%c0_20, %c0_21, %c0_22] : memref<1x8x128xf32, #tpu.memory_space<vmem>>, vector<1x8x128xf32>
      tpu.vector_store %arg6[%c0_20, %c0_21, %c0_22], %45 {strides = array<i32>} : memref<1x8x128xf32, #tpu.memory_space<vmem>>, vector<1x8x128xf32>,
    } else {
    }
    return
  }
  func.func @transform_0(%arg0: i32, %arg1: i32) -> (i32, i32) {
    %c0_i32 = arith.constant 0 : i32
    return %arg0, %arg1 : i32, i32
  }
  func.func @transform_1(%arg0: i32, %arg1: i32) -> (i32, i32) {
    %c0_i32 = arith.constant 0 : i32
    %c0_i32_0 = arith.constant 0 : i32
    return %arg1, %c0_i32 : i32, i32
  }
  func.func @transform_2(%arg0: i32, %arg1: i32) -> (i32, i32) {
    %c0_i32 = arith.constant 0 : i32
    %c0_i32_0 = arith.constant 0 : i32
    %c0_i32_1 = arith.constant 0 : i32
    return %c0_i32, %c0_i32_0 : i32, i32
  }
  func.func @transform_3(%arg0: i32, %arg1: i32) -> (i32, i32) {
    %c0_i32 = arith.constant 0 : i32
    %c0_i32_0 = arith.constant 0 : i32
    return %arg0, %c0_i32 : i32, i32
  }
  func.func @transform_4(%arg0: i32, %arg1: i32) -> (i32, i32, i32) {
    %c0_i32 = arith.constant 0 : i32
    %c0_i32_0 = arith.constant 0 : i32
    %c0_i32_1 = arith.constant 0 : i32
    return %arg0, %c0_i32, %c0_i32_0 : i32, i32, i32
  }
}

</mosaic_0001>

<llo_original>
// kernel: tpu_custom_call.1
$region0: #{tpu_custom_call.1}
  #allocation0 [shape = 'u32[]', space=smem, size = 0x4, offset = 0x4, fixed_abs, tag = 'smem constant byte address 0x4 - core index']
  #allocation1 [shape = 'u32[144,128]{1,0:T(1,128)}', space=vmem, size = 0x12000, scoped, tag = 'internal scratch']
  #allocation2 [shape = 'f32[16,256]{1,0:T(8,128)}', space=vmem, size = 0x4000, scoped, tag = 'scratch operand']
  %s0 = inlined_call_operand.vmem [shape: bf16[16,128], index: 0, kind: input, shape index: {}]
  %s1 = inlined_call_operand.hbm [shape: bf16[128,256], index: 1, kind: input, shape index: {}]
  %s2 = inlined_call_operand.vmem [shape: f32[1,256], index: 2, kind: input, shape index: {}]
  %s3 = inlined_call_operand.vmem [shape: s32[16,1], index: 3, kind: input, shape index: {}]
  %s4 = inlined_call_operand.hbm [shape: f32[1,8,128], index: 4, kind: output, shape index: {}]
  %s5 = sld [smem:[#allocation0]]
  $region38: #{tpu_custom_call.1} parent=0
    _
  %s7 = ssub.s32 1, %s5
  %s8 = scalar_select 0, %s7, %s5
  $region1: #{tpu_custom_call.1} parent=0
    #allocation3 [shape = 'u8[65536]{0}', space=vmem, size = 0x10000, scoped, tag = 'input window, operand 1, single buffered']
    #allocation4 [shape = 's32[1]{0}', space=sflag, size = 0x4, scoped, tag = 'scoped memory for tpu_custom_call.1']
    #allocation5 [shape = 's32[1]{0}', space=sflag, size = 0x4, scoped, tag = 'scoped memory for tpu_custom_call.1']
    #allocation6 [shape = 'u8[4096]{0}', space=vmem, size = 0x1000, scoped, tag = 'output window, operand 0, single buffered']
    %9 = vsyncpa [#allocation4], 0
    %10 = vsyncpa [#allocation5], 0
    // Predicated region
    $region2: #{tpu_custom_call.1} parent=1 // pred_check
      _
    $region3: #{tpu_custom_call.1} parent=1 // pred_check_branch
      %12 = sbr.rel (0) target = $region5
    $region4: #{tpu_custom_call.1} parent=1 // pred_region
      _
    $region5: #{tpu_custom_call.1} parent=1 // pred_fallthru
      _
    // Predicated region
    $region6: #{tpu_custom_call.1} parent=1 // pred_check
      _
    $region7: #{tpu_custom_call.1} parent=1 // pred_check_branch
      %14 = sbr.rel (0) target = $region9
    $region8: #{tpu_custom_call.1} parent=1 // pred_region
      %s16 = ssub.s32 2048, 2048
      %17 = vsyncadd [#allocation4], %s16
      %s18 = sshll.u32 [#allocation3], 4
      %s19 = int_to_ptr.vmem [resolvable:$true] %s18
      %24 = dma.hbm_to_vmem [thread:$0]  %s1, 2048, %s19, [#allocation4], 128, 128, 8
    $region9: #{tpu_custom_call.1} parent=1 // pred_fallthru
      _
    // Predicated region
    $region10: #{tpu_custom_call.1} parent=1 // pred_check
      _
    $region11: #{tpu_custom_call.1} parent=1 // pred_check_branch
      %26 = sbr.rel (0) target = $region13
    $region12: #{tpu_custom_call.1} parent=1 // pred_region
      _
    $region13: #{tpu_custom_call.1} parent=1 // pred_fallthru
      _
    // Predicated region
    $region14: #{tpu_custom_call.1} parent=1 // pred_check
      _
    $region15: #{tpu_custom_call.1} parent=1 // pred_check_branch
      %28 = sbr.rel (0) target = $region17
    $region16: #{tpu_custom_call.1} parent=1 // pred_region
      _
    $region17: #{tpu_custom_call.1} parent=1 // pred_fallthru
      _
    // Predicated region
    $region18: #{tpu_custom_call.1} parent=1 // pred_check
      _
    $region19: #{tpu_custom_call.1} parent=1 // pred_check_branch
      %30 = sbr.rel (0) target = $region21
    $region20: #{tpu_custom_call.1} parent=1 // pred_region
      %31 = dma.done [#allocation4], 2048
    $region21: #{tpu_custom_call.1} parent=1 // pred_fallthru
      _
    %p33 = scmp.eq.s32.totalorder 0, 0
    // Predicated region
    $region22: #{tpu_custom_call.1} parent=1 // pred_check
      %p34 = pneg %p33
    $region23: #{tpu_custom_call.1} parent=1 // pred_check_branch
      %36 = sbr.rel (%p34) target = $region25
    $region24: #{tpu_custom_call.1} parent=1 // pred_region
      %v37 = vld [vmem:[%s2] sm:$0x3]
      %v39 = vlaneseq
      %v40 = vshrl.u32 %v39, 7
      %v41 = vsub.s32 0, %v40
      %v42 = vrot.slane %v37, %v41
      %v43 = vlaneseq
      %v44 = vshrl.u32 %v43, 7
      %v45 = vsub.s32 1, %v44
      %v46 = vrot.slane %v37, %v45
      %49 = vst [vmem:[#allocation2] sm:$0xff] %v42
      %50 = vst [vmem:[#allocation2 + $0x8] sm:$0xff] %v46
      %51 = vst [vmem:[#allocation2 + $0x10] sm:$0xff] %v42
      %52 = vst [vmem:[#allocation2 + $0x18] sm:$0xff] %v46
    $region25: #{tpu_custom_call.1} parent=1 // pred_fallthru
      _
    %v53 = vld [vmem:[#allocation2] sm:$0xff]
    %v54 = vld [vmem:[#allocation2 + $0x8] sm:$0xff]
    %v55 = vld [vmem:[#allocation2 + $0x10] sm:$0xff]
    %v56 = vld [vmem:[#allocation2 + $0x18] sm:$0xff]
    %v57 = vld [vmem:[%s0] sm:$0xf]
    %v58 = vld [vmem:[%s0 + $0x4] sm:$0xf]
    %v59 = vld [vmem:[#allocation3] sm:$0xff]
    %v60 = vld [vmem:[#allocation3 + $0x8] sm:$0xff]
    %v61 = vld [vmem:[#allocation3 + $0x10] sm:$0xff]
    %v62 = vld [vmem:[#allocation3 + $0x18] sm:$0xff]
    %v63 = vld [vmem:[#allocation3 + $0x20] sm:$0xff]
    %v64 = vld [vmem:[#allocation3 + $0x28] sm:$0xff]
    %v65 = vld [vmem:[#allocation3 + $0x30] sm:$0xff]
    %v66 = vld [vmem:[#allocation3 + $0x38] sm:$0xff]
    %v67 = vld [vmem:[#allocation3 + $0x40] sm:$0xff]
    %v68 = vld [vmem:[#allocation3 + $0x48] sm:$0xff]
    %v69 = vld [vmem:[#allocation3 + $0x50] sm:$0xff]
    %v70 = vld [vmem:[#allocation3 + $0x58] sm:$0xff]
    %v71 = vld [vmem:[#allocation3 + $0x60] sm:$0xff]
    %v72 = vld [vmem:[#allocation3 + $0x68] sm:$0xff]
    %v73 = vld [vmem:[#allocation3 + $0x70] sm:$0xff]
    %v74 = vld [vmem:[#allocation3 + $0x78] sm:$0xff]
    %v77 = vunpack.c.l.b16 %v57
    %v78 = vunpack.c.l.b16 %v58
    %v79 = vpack.c.b16 %v78, %v77
    %v97 = vunpack.c.l.b16 %v59
    %v98 = vunpack.c.h.b16 %v59
    %v99 = vunpack.c.l.b16 %v60
    %v100 = vunpack.c.h.b16 %v60
    %v101 = vunpack.c.l.b16 %v61
    %v102 = vunpack.c.h.b16 %v61
    %v103 = vunpack.c.l.b16 %v62
    %v104 = vunpack.c.h.b16 %v62
    %v105 = vunpack.c.l.b16 %v63
    %v106 = vunpack.c.h.b16 %v63
    %v107 = vunpack.c.l.b16 %v64
    %v108 = vunpack.c.h.b16 %v64
    %v109 = vunpack.c.l.b16 %v65
    %v110 = vunpack.c.h.b16 %v65
    %v111 = vunpack.c.l.b16 %v66
    %v112 = vunpack.c.h.b16 %v66
    %v113 = vunpack.c.l.b16 %v67
    %v114 = vunpack.c.h.b16 %v67
    %v115 = vunpack.c.l.b16 %v68
    %v116 = vunpack.c.h.b16 %v68
    %v117 = vunpack.c.l.b16 %v69
    %v118 = vunpack.c.h.b16 %v69
    %v119 = vunpack.c.l.b16 %v70
    %v120 = vunpack.c.h.b16 %v70
    %v121 = vunpack.c.l.b16 %v71
    %v122 = vunpack.c.h.b16 %v71
    %v123 = vunpack.c.l.b16 %v72
    %v124 = vunpack.c.h.b16 %v72
    %v125 = vunpack.c.l.b16 %v73
    %v126 = vunpack.c.h.b16 %v73
    %v127 = vunpack.c.l.b16 %v74
    %v128 = vunpack.c.h.b16 %v74
    %v129 = vpack.c.b16 %v99, %v97
    %v130 = vpack.c.b16 %v100, %v98
    %v131 = vpack.c.b16 %v103, %v101
    %v132 = vpack.c.b16 %v104, %v102
    %v133 = vpack.c.b16 %v107, %v105
    %v134 = vpack.c.b16 %v108, %v106
    %v135 = vpack.c.b16 %v111, %v109
    %v136 = vpack.c.b16 %v112, %v110
    %v137 = vpack.c.b16 %v115, %v113
    %v138 = vpack.c.b16 %v116, %v114
    %v139 = vpack.c.b16 %v119, %v117
    %v140 = vpack.c.b16 %v120, %v118
    %v141 = vpack.c.b16 %v123, %v121
    %v142 = vpack.c.b16 %v124, %v122
    %v143 = vpack.c.b16 %v127, %v125
    %v144 = vpack.c.b16 %v128, %v126
    %161 = vmatprep.subr.bf16.mxu0 %v130
    %162 = vmatpush1.bf16.msra.mxu0 %v129
    %163 = vmatprep.subr.bf16.mxu0 %v132
    %164 = vmatpush1.bf16.msra.mxu0 %v131
    %165 = vmatprep.subr.bf16.mxu0 %v134
    %166 = vmatpush1.bf16.msra.mxu0 %v133
    %167 = vmatprep.subr.bf16.mxu0 %v136
    %168 = vmatpush1.bf16.msra.mxu0 %v135
    %169 = vmatprep.subr.bf16.mxu0 %v138
    %170 = vmatpush1.bf16.msra.mxu0 %v137
    %171 = vmatprep.subr.bf16.mxu0 %v140
    %172 = vmatpush1.bf16.msra.mxu0 %v139
    %173 = vmatprep.subr.bf16.mxu0 %v142
    %174 = vmatpush1.bf16.msra.mxu0 %v141
    %175 = vmatprep.subr.bf16.mxu0 %v144
    %176 = vmatpush1.bf16.msra.mxu0 %v143
    %177 = vmatprep.subr.bf16.mxu0 0
    %178 = vmatpush1.bf16.msra.mxu0 0
    %179 = vmatprep.subr.bf16.mxu0 0
    %180 = vmatpush1.bf16.msra.mxu0 0
    %181 = vmatprep.subr.bf16.mxu0 0
    %182 = vmatpush1.bf16.msra.mxu0 0
    %183 = vmatprep.subr.bf16.mxu0 0
    %184 = vmatpush1.bf16.msra.mxu0 0
    %185 = vmatprep.subr.bf16.mxu0 0
    %186 = vmatpush1.bf16.msra.mxu0 0
    %187 = vmatprep.subr.bf16.mxu0 0
    %188 = vmatpush1.bf16.msra.mxu0 0
    %189 = vmatprep.subr.bf16.mxu0 0
    %190 = vmatpush1.bf16.msra.mxu0 0
    %191 = vmatprep.subr.bf16.mxu0 0
    %192 = vmatpush1.bf16.msra.mxu0 0
    %193 = vmatprep.mubr.bf16.mxu0 0
    %194 = vmatmul.mubr.bf16.gmra.mrb[0].mxu0 %v79
    %v195 = vpop.f32.mrb[0].mxu0
    %v196 = vadd.f32 0.0, %v195
    %v197 = vpop.f32.mrb[0].mxu0
    %v198 = vadd.f32 0.0, %v197
    %v199 = vpop.f32.mrb[0].mxu0
    %v200 = vadd.f32 0.0, %v199
    %v201 = vpop.f32.mrb[0].mxu0
    %v202 = vadd.f32 0.0, %v201
    %203 = vdwg.mxu0
    %v204 = vadd.f32 %v53, %v196
    %v205 = vadd.f32 %v54, %v198
    %v206 = vadd.f32 %v55, %v200
    %v207 = vadd.f32 %v56, %v202
    %208 = vst [vmem:[#allocation2] sm:$0xff] %v204
    %209 = vst [vmem:[#allocation2 + $0x8] sm:$0xff] %v205
    %210 = vst [vmem:[#allocation2 + $0x10] sm:$0xff] %v206
    %211 = vst [vmem:[#allocation2 + $0x18] sm:$0xff] %v207
    // Predicated region
    $region26: #{tpu_custom_call.1} parent=1 // pred_check
      %p212 = pneg %p33
    $region27: #{tpu_custom_call.1} parent=1 // pred_check_branch
      %214 = sbr.rel (%p212) target = $region29
    $region28: #{tpu_custom_call.1} parent=1 // pred_region
      %v215 = vld [vmem:[#allocation2] sm:$0xff]
      %v216 = vld [vmem:[#allocation2 + $0x8] sm:$0xff]
      %v217 = vld [vmem:[#allocation2 + $0x10] sm:$0xff]
      %v218 = vld [vmem:[#allocation2 + $0x18] sm:$0xff]
      %v219 = vmax.f32 %v215, %v216
      %220 = vmax.xlane.f32.xlu0 %v219
      %v221 = vpop.xlane.xlu0 %220
      %v222 = vmax.f32 %v217, %v218
      %223 = vmax.xlane.f32.xlu0 %v222
      %v224 = vpop.xlane.xlu0 %223
      %v225 = vsub.f32 %v215, %v221
      %v226 = vsub.f32 %v216, %v221
      %v227 = vsub.f32 %v217, %v224
      %v228 = vsub.f32 %v218, %v224
      %v229 = vmul.f32 %v225, 1.442695
      %v230 = vpow.pop %v229
      %v231 = vmul.f32 %v226, 1.442695
      %v232 = vpow.pop %v231
      %v233 = vmul.f32 %v227, 1.442695
      %v234 = vpow.pop %v233
      %v235 = vmul.f32 %v228, 1.442695
      %v236 = vpow.pop %v235
      %v237 = vadd.f32 %v230, %v232
      %238 = vadd.xlane.f32.xlu0 %v237
      %v239 = vpop.xlane.xlu0 %238
      %v240 = vadd.f32 %v234, %v236
      %241 = vadd.xlane.f32.xlu0 %v240
      %v242 = vpop.xlane.xlu0 %241
      %v243 = vlog2.pop %v239
      %v244 = vmul.f32 %v243, 0.6931472
      %v245 = vlog2.pop %v242
      %v246 = vmul.f32 %v245, 0.6931472
      %v247 = vadd.f32 %v244, %v221
      %v248 = vadd.f32 %v246, %v224
      %v249 = vld [vmem:[%s3] sm:$0xff]
      %v250 = vld [vmem:[%s3 + $0x8] sm:$0xff]
      %v251 = vlaneseq
      %v252 = vand.u32 %v251, 127
      %v253 = vadd.s32 %v252, 128
      %254 = vset.pattern.permute.xlu0 0
      %255 = vperm.xlu0 %254, %v249
      %v256 = vpop.permute.xlu0 %255
      %257 = vset.pattern.permute.xlu0 0
      %258 = vperm.xlu0 %257, %v250
      %v259 = vpop.permute.xlu0 %258
      %vm260 = vcmp.eq.s32.totalorder %v252, %v256
      %vm261 = vcmp.eq.s32.totalorder %v253, %v256
      %vm262 = vcmp.eq.s32.totalorder %v252, %v259
      %vm263 = vcmp.eq.s32.totalorder %v253, %v259
      %v264 = vsel %vm260, %v215, 0.0
      %v265 = vsel %vm261, %v216, 0.0
      %v266 = vsel %vm262, %v217, 0.0
      %v267 = vsel %vm263, %v218, 0.0
      %v268 = vadd.f32 %v264, %v265
      %269 = vadd.xlane.f32.xlu0 %v268
      %v270 = vpop.xlane.xlu0 %269
      %v271 = vadd.f32 %v266, %v267
      %272 = vadd.xlane.f32.xlu0 %v271
      %v273 = vpop.xlane.xlu0 %272
      %v274 = vsub.f32 %v247, %v270
      %v275 = vsub.f32 %v248, %v273
      %s276 = smul.u32 0, 16
      %v277 = vlaneseq
      %v278 = vshrl.u32 %v277, 7
      %v279 = vadd.s32 %v278, 8
      %v280 = vstv %s276
      %v281 = vadd.s32 %v280, %v278
      %v282 = vadd.s32 %v280, %v279
      %vm283 = vcmp.lt.s32.totalorder %v281, 8
      %vm284 = vcmp.lt.s32.totalorder %v282, 8
      %v285 = vsel %vm283, %v274, 0.0
      %v286 = vsel %vm284, %v275, 0.0
      %vm287 = vcmask 7168
      %v288 = vsel %vm287, %v285, 0.0
      %v289 = vsel %vm287, %v286, 0.0
      %v290 = vadd.f32 %v288, %v289
      %291 = vadd.xlane.f32.xlu0 %v290
      %v292 = vpop.xlane.xlu0 %291
      %v293 = vrot.slane %v292, 4
      %v294 = vadd.f32 %v292, %v293
      %v295 = vrot.slane %v294, 2
      %v296 = vadd.f32 %v294, %v295
      %v297 = vrot.slane %v296, 1
      %v298 = vadd.f32 %v296, %v297
      %s299 = vtos %v298
      %v300 = vstv %s299
      %301 = vst [vmem:[#allocation6] sm:$0xff] %v300
    $region29: #{tpu_custom_call.1} parent=1 // pred_fallthru
      _
    // Predicated region
    $region30: #{tpu_custom_call.1} parent=1 // pred_check
      _
    $region31: #{tpu_custom_call.1} parent=1 // pred_check_branch
      %303 = sbr.rel (0) target = $region33
    $region32: #{tpu_custom_call.1} parent=1 // pred_region
      %s305 = ssub.s32 128, 128
      %306 = vsyncadd [#allocation5], %s305
      %s308 = sshll.u32 [#allocation6], 4
      %s309 = int_to_ptr.vmem [resolvable:$true] %s308
      %311 = dma.vmem_to_hbm [thread:$0]  %s309, 128, %s4, [#allocation5]
    $region33: #{tpu_custom_call.1} parent=1 // pred_fallthru
      _
    // Predicated region
    $region34: #{tpu_custom_call.1} parent=1 // pred_check
      _
    $region35: #{tpu_custom_call.1} parent=1 // pred_check_branch
      %313 = sbr.rel (0) target = $region37
    $region36: #{tpu_custom_call.1} parent=1 // pred_region
      %314 = dma.done [#allocation5], 128
    $region37: #{tpu_custom_call.1} parent=1 // pred_fallthru
      _
    %315 = vsyncpa [#allocation4], 1
    %316 = vsyncpa [#allocation5], 1

</llo_original>
